<compile_context>
chip_gen: v7x
topology: tpu7x:2x2x1
jax: 0.10.0
libtpu: 0.0.40
codegen_flags: <defaults>
</compile_context>

<pallas_src>
import functools
import math

import jax
import jax.numpy as jnp
from jax.experimental import pallas as pl
from jax.experimental.pallas import tpu as pltpu

LANES = 128
MAX_TILE_ROWS = 8192            # 8192 * 128 * 4 B = 4 MiB per f32 block
VMEM_LIMIT_FLOOR = 32 << 20     # never lower than the v6e/v7x default
VMEM_LIMIT_CAP = 48 << 20       # safe headroom under v7x's 64 MiB physical VMEM
DEFAULT_MIN_PALLAS_ELEMS = 65536  # below this, plain jnp beats a Pallas launch


def _round_up(x, m):
    return (x + m - 1) // m * m


def _sublane(dtype):
    """Native sublane tile height for a dtype: f32->8, bf16->16, int8/fp8->32."""
    return max(8, 32 // jnp.dtype(dtype).itemsize)


# ---------------------------------------------------------------------------
# Kernels
# ---------------------------------------------------------------------------
def _xtanh_elem_kernel(yt_ref, yp_ref, out_ref):
    """Elementwise x * tanh(x) on the error (reduction='none')."""
    ey = yt_ref[...].astype(jnp.float32) - yp_ref[...].astype(jnp.float32) + 1e-12
    out_ref[...] = (ey * jnp.tanh(ey)).astype(out_ref.dtype)


def _xtanh_partial_kernel(yt_ref, yp_ref, part_ref, *, tile_rows, n_rows, num_blocks):
    """Per-block partial sums of x * tanh(x), reduced to an (8, 128) f32 tile.

    Grid axis is 'parallel': each block writes its own output slot; the final
    cross-lane sum and divide-by-n happen in the wrapper (two-stage reduction).
    """
    i = pl.program_id(0)

    ey = yt_ref[...].astype(jnp.float32) - yp_ref[...].astype(jnp.float32) + 1e-12
    val = ey * jnp.tanh(ey)  # (tile_rows, LANES) f32

    def _reduce(v):
        # (tile_rows, 128) -> (tile_rows//8, 8, 128) -> sum over leading axis.
        # Pure VPU adds; no cross-lane reduce in the hot loop.
        return v.reshape(tile_rows // 8, 8, LANES).sum(axis=0)

    if n_rows % tile_rows == 0:
        # Every block is fully in-bounds: no mask, single write.
        part_ref[...] = _reduce(val)
    else:
        # Ragged last block: its out-of-bounds rows hold unspecified data
        # (possibly NaN/Inf).  jnp.where selects 0.0 there and does NOT
        # propagate NaN from the unselected branch, so the partial stays clean.
        @pl.when(i != num_blocks - 1)
        def _():
            part_ref[...] = _reduce(val)

        @pl.when(i == num_blocks - 1)
        def _():
            row = (
                jax.lax.broadcasted_iota(jnp.int32, (tile_rows, LANES), 0)
                + i * tile_rows
            )
            part_ref[...] = _reduce(jnp.where(row < n_rows, val, 0.0))


# ---------------------------------------------------------------------------
# Wrapper
# ---------------------------------------------------------------------------
@functools.partial(jax.jit, static_argnames=("reduction", "min_pallas_elems"))
def xtanh_loss(y_t, y_prime_t, reduction="mean", *,
               min_pallas_elems=DEFAULT_MIN_PALLAS_ELEMS):
    assert y_t.shape == y_prime_t.shape
    if reduction not in ("mean", "none"):
        raise ValueError(f"Unsupported reduction: {reduction}")

    orig_shape = y_t.shape
    dtype = y_t.dtype
    n = math.prod(orig_shape) if orig_shape else 1

    # ---- small-input fast path: plain XLA fusion beats a Pallas launch ----
    if n < max(min_pallas_elems, LANES):
        ey = y_t.astype(jnp.float32) - y_prime_t.astype(jnp.float32) + 1e-12
        v = ey * jnp.tanh(ey)
        if reduction == "mean":
            return jnp.mean(v).astype(dtype)
        return v.astype(dtype).reshape(orig_shape)

    # ---- lane-dense (M, 128) slab; strip (don't pad) any <128-elem tail ----
    rem = n % LANES
    n_main = n - rem
    flat_t = y_t.reshape(-1)          # contiguous reshape: metadata only
    flat_p = y_prime_t.reshape(-1)
    if rem == 0:
        yt2d = flat_t.reshape(-1, LANES)
        yp2d = flat_p.reshape(-1, LANES)
    else:
        yt2d = jax.lax.slice(flat_t, (0,), (n_main,)).reshape(-1, LANES)
        yp2d = jax.lax.slice(flat_p, (0,), (n_main,)).reshape(-1, LANES)
    M = n_main // LANES

    # ---- tiling: dtype-aware sublane rounding, big blocks, raised VMEM ----
    sub = _sublane(dtype)
    tile_rows = min(MAX_TILE_ROWS, _round_up(M, sub))
    num_blocks = pl.cdiv(M, tile_rows)
    grid = (num_blocks,)
    in_spec = pl.BlockSpec((tile_rows, LANES), lambda i: (i, 0))

    elem_bytes = jnp.dtype(dtype).itemsize
    in_block_bytes = tile_rows * LANES * elem_bytes
    f32_block_bytes = tile_rows * LANES * 4
    out_block_bytes = in_block_bytes if reduction == "none" else 8 * LANES * 4
    # 2 inputs x 2 buffers + 2 output buffers + f32 elementwise temps, + slack.
    needed = 2 * 2 * in_block_bytes + 2 * out_block_bytes + 2 * f32_block_bytes
    vmem_limit = min(max(VMEM_LIMIT_FLOOR, int(needed * 1.25)), VMEM_LIMIT_CAP)
    cparams = pltpu.CompilerParams(
        dimension_semantics=("parallel",),
        vmem_limit_bytes=vmem_limit,
    )

    def _tail_vals():
        t = jax.lax.slice(flat_t, (n_main,), (n,)).astype(jnp.float32)
        p = jax.lax.slice(flat_p, (n_main,), (n,)).astype(jnp.float32)
        ey = t - p + 1e-12
        return ey * jnp.tanh(ey)

    if reduction == "none":
        cost = pl.CostEstimate(
            flops=4 * n_main,
            transcendentals=n_main,
            bytes_accessed=3 * n_main * elem_bytes,
        )
        out2d = pl.pallas_call(
            _xtanh_elem_kernel,
            out_shape=jax.ShapeDtypeStruct((M, LANES), dtype),
            grid=grid,
            in_specs=[in_spec, in_spec],
            out_specs=pl.BlockSpec((tile_rows, LANES), lambda i: (i, 0)),
            compiler_params=cparams,
            cost_estimate=cost,
        )(yt2d, yp2d)
        if rem == 0:
            return out2d.reshape(orig_shape)  # free metadata reshape
        # Stitch the <128-element tail computed with plain jnp.
        tail = _tail_vals().astype(dtype)
        return jnp.concatenate([out2d.reshape(-1), tail]).reshape(orig_shape)

    else:  # reduction == "mean"
        kernel = functools.partial(
            _xtanh_partial_kernel,
            tile_rows=tile_rows,
            n_rows=M,
            num_blocks=num_blocks,
        )
        cost = pl.CostEstimate(
            flops=5 * n_main,
            transcendentals=n_main,
            bytes_accessed=2 * n_main * elem_bytes + num_blocks * 8 * LANES * 4,
        )
        partials = pl.pallas_call(
            kernel,
            out_shape=jax.ShapeDtypeStruct((num_blocks, 8, LANES), jnp.float32),
            grid=grid,
            in_specs=[in_spec, in_spec],
            out_specs=pl.BlockSpec((None, 8, LANES), lambda i: (i, 0, 0)),
            compiler_params=cparams,
            cost_estimate=cost,
        )(yt2d, yp2d)
        # Stage 2: tiny f32 reduction over num_blocks * 8 * 128 partial sums.
        # NOTE: single-pass f32 accumulation; fine for a loss value.
        total = jnp.sum(partials, dtype=jnp.float32)
        if rem:
            total = total + jnp.sum(_tail_vals())
        return (total / n).astype(dtype)


# ---------------------------------------------------------------------------
# Demo / self-check
# ---------------------------------------------------------------------------
if __name__ == "__main__":
    key = jax.random.PRNGKey(0)
    k1, k2, k3, k4 = jax.random.split(key, 4)

    def ref(y_t, y_p, reduction):
        ey = y_t.astype(jnp.float32) - y_p.astype(jnp.float32) + 1e-12
        v = ey * jnp.tanh(ey)
        return jnp.mean(v) if reduction == "mean" else v

    # Small NCHW-style shape: batch=2, channels=4, spatial=16x16.
    y_t = jax.random.normal(k1, (2, 4, 16, 16), dtype=jnp.float32)
    y_p = jax.random.normal(k2, (2, 4, 16, 16), dtype=jnp.float32)

    # 1) Force the Pallas path even at this small size.
    loss_mean = jax.block_until_ready(
        xtanh_loss(y_t, y_p, reduction="mean", min_pallas_elems=0))
    loss_none = jax.block_until_ready(
        xtanh_loss(y_t, y_p, reduction="none", min_pallas_elems=0))
    assert jnp.allclose(loss_mean, ref(y_t, y_p, "mean"), atol=1e-6, rtol=1e-6)
    assert jnp.allclose(loss_none, ref(y_t, y_p, "none"), atol=1e-6, rtol=1e-6)
    assert loss_none.shape == y_t.shape and loss_none.dtype == y_t.dtype

    # 2) Default small-input fast path (plain jnp, no Pallas launch).
    loss_mean_fast = jax.block_until_ready(xtanh_loss(y_t, y_p, reduction="mean"))
    assert jnp.allclose(loss_mean_fast, ref(y_t, y_p, "mean"), atol=1e-6, rtol=1e-6)

    # 3) Ragged shape (n % 128 != 0): Pallas slab + jnp tail stitch (no padding).
    y_tr = jax.random.normal(k3, (2, 3, 11, 13), dtype=jnp.float32)
    y_pr = jax.random.normal(k4, (2, 3, 11, 13), dtype=jnp.float32)
    mean_r = jax.block_until_ready(
        xtanh_loss(y_tr, y_pr, reduction="mean", min_pallas_elems=0))
    none_r = jax.block_until_ready(
        xtanh_loss(y_tr, y_pr, reduction="none", min_pallas_elems=0))
    assert jnp.allclose(mean_r, ref(y_tr, y_pr, "mean"), atol=1e-6, rtol=1e-6)
    assert jnp.allclose(none_r, ref(y_tr, y_pr, "none"), atol=1e-6, rtol=1e-6)
    assert none_r.shape == y_tr.shape

    # 4) bf16 inputs exercise the dtype-aware (16, 128) sublane tile.
    y_tb = y_t.astype(jnp.bfloat16)
    y_pb = y_p.astype(jnp.bfloat16)
    mean_b = jax.block_until_ready(
        xtanh_loss(y_tb, y_pb, reduction="mean", min_pallas_elems=0))
    assert jnp.allclose(mean_b.astype(jnp.float32), ref(y_tb, y_pb, "mean"),
                        atol=2e-2, rtol=2e-2)

    print("KERNEL_OK")
</pallas_src>

<mosaic_0001>
module attributes {stable_mosaic.version = 11 : i64} {
  func.func @_xtanh_partial_kernel(%arg0: i32, %arg1: memref<16x128xf32, #tpu.memory_space<vmem>>, %arg2: memref<16x128xf32, #tpu.memory_space<vmem>>, %arg3: memref<1x8x128xf32, #tpu.memory_space<vmem>>) attributes {dimension_semantics = [#tpu.dimension_semantics<parallel>], iteration_bounds = array<i64: 1>, scalar_prefetch = 0 : i64, scratch_operands = 0 : i64, tpu.core_type = #tpu.core_type<tc>, window_params = [{transform_indices = @transform_0, window_bounds = array<i64: 16, 128>}, {transform_indices = @transform_1, window_bounds = array<i64: 16, 128>}, {transform_indices = @transform_2, window_bounds = array<i64: 1, 8, 128>}]} {
    %c0 = arith.constant 0 : index
    %c0_0 = arith.constant 0 : index
    %0 = vector.load %arg1[%c0, %c0_0] : memref<16x128xf32, #tpu.memory_space<vmem>>, vector<16x128xf32>
    %c0_1 = arith.constant 0 : index
    %c0_2 = arith.constant 0 : index
    %1 = vector.load %arg2[%c0_1, %c0_2] : memref<16x128xf32, #tpu.memory_space<vmem>>, vector<16x128xf32>
    %2 = arith.subf %0, %1 : vector<16x128xf32>
    %cst = arith.constant 9.99999996E-13 : f32
    %3 = vector.broadcast %cst : f32 to vector<16x128xf32>
    %4 = arith.addf %2, %3 : vector<16x128xf32>
    %5 = math.tanh %4 : vector<16x128xf32>
    %6 = arith.mulf %4, %5 : vector<16x128xf32>
    %7 = vector.shape_cast %6 : vector<16x128xf32> to vector<2x8x128xf32>
    %cst_3 = arith.constant dense<0.000000e+00> : vector<8x128xf32>
    %8 = vector.multi_reduction <add>, %7, %cst_3 [0] : vector<2x8x128xf32> to vector<8x128xf32>
    %c0_4 = arith.constant 0 : index
    %c0_5 = arith.constant 0 : index
    %c0_6 = arith.constant 0 : index
    %9 = vector.load %arg3[%c0_4, %c0_5, %c0_6] : memref<1x8x128xf32, #tpu.memory_space<vmem>>, vector<1x8x128xf32>
    %10 = vector.shape_cast %9 : vector<1x8x128xf32> to vector<8x128xf32>
    %11 = vector.shape_cast %8 : vector<8x128xf32> to vector<1x8x128xf32>
    tpu.vector_store %arg3[%c0_4, %c0_5, %c0_6], %11 {strides = array<i32>} : memref<1x8x128xf32, #tpu.memory_space<vmem>>, vector<1x8x128xf32>,
    return
  }
  func.func @transform_0(%arg0: i32) -> (i32, i32) {
    %c0_i32 = arith.constant 0 : i32
    %c0_i32_0 = arith.constant 0 : i32
    return %arg0, %c0_i32 : i32, i32
  }
  func.func @transform_1(%arg0: i32) -> (i32, i32) {
    %c0_i32 = arith.constant 0 : i32
    %c0_i32_0 = arith.constant 0 : i32
    return %arg0, %c0_i32 : i32, i32
  }
  func.func @transform_2(%arg0: i32) -> (i32, i32, i32) {
    %c0_i32 = arith.constant 0 : i32
    %c0_i32_0 = arith.constant 0 : i32
    %c0_i32_1 = arith.constant 0 : i32
    return %arg0, %c0_i32, %c0_i32_0 : i32, i32, i32
  }
}

</mosaic_0001>

<llo_original>
// kernel: xtanh_loss.1
$region0: #{xtanh_loss.1}
  #allocation0 [shape = 'u32[]', space=smem, size = 0x4, offset = 0x4, fixed_abs, tag = 'smem constant byte address 0x4 - core index']
  #allocation1 [shape = 'u32[144,128]{1,0:T(1,128)}', space=vmem, size = 0x12000, scoped, tag = 'internal scratch']
  %s0 = inlined_call_operand.vmem [shape: f32[16,128], index: 0, kind: input, shape index: {}]
  %s1 = inlined_call_operand.vmem [shape: f32[16,128], index: 1, kind: input, shape index: {}]
  %s2 = inlined_call_operand.vmem [shape: f32[1,8,128], index: 2, kind: output, shape index: {}]
  %s3 = sld [smem:[#allocation0]]
  $region18: #{xtanh_loss.1} parent=0
    _
  %s5 = ssub.s32 1, %s3
  %s6 = scalar_select 0, %s5, %s3
  // Predicated region
  $region2: #{xtanh_loss.1} parent=0 // pred_check
    _
  $region3: #{xtanh_loss.1} parent=0 // pred_check_branch
    %8 = sbr.rel (0) target = $region5
  $region4: #{xtanh_loss.1} parent=0 // pred_region
    _
  $region5: #{xtanh_loss.1} parent=0 // pred_fallthru
    _
  // Predicated region
  $region6: #{xtanh_loss.1} parent=0 // pred_check
    _
  $region7: #{xtanh_loss.1} parent=0 // pred_check_branch
    %10 = sbr.rel (0) target = $region9
  $region8: #{xtanh_loss.1} parent=0 // pred_region
    _
  $region9: #{xtanh_loss.1} parent=0 // pred_fallthru
    _
  %v11 = vld [vmem:[%s0] sm:$0xff]
  %v12 = vld [vmem:[%s0 + $0x8] sm:$0xff]
  %v13 = vld [vmem:[%s1] sm:$0xff]
  %v14 = vld [vmem:[%s1 + $0x8] sm:$0xff]
  %v15 = vsub.f32 %v11, %v13
  %v16 = vsub.f32 %v12, %v14
  %v17 = vadd.f32 %v15, 1e-12
  %v18 = vadd.f32 %v16, 1e-12
  %v19 = vtanh.pop %v17
  %v20 = vtanh.pop %v18
  %v21 = vmul.f32 %v17, %v19
  %v22 = vmul.f32 %v18, %v20
  %v23 = vadd.f32 %v21, %v22
  %24 = vst [vmem:[%s2] sm:$0xff] %v23
  // Predicated region
  $region10: #{xtanh_loss.1} parent=0 // pred_check
    _
  $region11: #{xtanh_loss.1} parent=0 // pred_check_branch
    %26 = sbr.rel (0) target = $region13
  $region12: #{xtanh_loss.1} parent=0 // pred_region
    _
  $region13: #{xtanh_loss.1} parent=0 // pred_fallthru
    _
  // Predicated region
  $region14: #{xtanh_loss.1} parent=0 // pred_check
    _
  $region15: #{xtanh_loss.1} parent=0 // pred_check_branch
    %28 = sbr.rel (0) target = $region17
  $region16: #{xtanh_loss.1} parent=0 // pred_region
    _
  $region17: #{xtanh_loss.1} parent=0 // pred_fallthru
    _

</llo_original>
